<compile_context>
chip_gen: v7x
topology: tpu7x:2x2x1
jax: 0.10.0
libtpu: 0.0.40
codegen_flags: <defaults>
</compile_context>

<pallas_src>
import math

import jax
import jax.numpy as jnp
from jax.experimental import pallas as pl
from jax.experimental.pallas import tpu as pltpu


def gc_block_kernel(x_ref, w1_ref, att1_ref, bn1_ref,
                    w2_ref, att2_ref, bn2_ref, o_ref):
    bt, n, f = x_ref.shape            # unpadded input tile (Bt, N, F)
    fp = w1_ref.shape[1]              # padded feature dim (multiple of 128)

    def layer(h2d, w_ref, att_ref, bn_ref):
        # (Bt*N, K) @ (K, Fp): one tall, lane-dense matmul over the whole tile.
        sup = jnp.dot(h2d, w_ref[...],
                      preferred_element_type=jnp.float32).reshape(bt, n, fp)
        # Single batched contraction for att @ sup (no per-batch loop / concat).
        att = jnp.broadcast_to(att_ref[...], (bt, n, n))
        y = jnp.einsum('bnm,bmf->bnf', att, sup,
                       preferred_element_type=jnp.float32)
        # Folded BatchNorm (+ GC bias) affine, then tanh; Dropout == identity.
        y = y * bn_ref[0][None] + bn_ref[1][None]
        return jnp.tanh(y)

    y = layer(x_ref[...].reshape(bt * n, f), w1_ref, att1_ref, bn1_ref)
    y = layer(y.reshape(bt * n, fp), w2_ref, att2_ref, bn2_ref)
    # Drop padded lanes in-kernel, add residual (re-read x only here), store unpadded.
    o_ref[...] = (y[:, :, :f] + x_ref[...]).astype(o_ref.dtype)


def _device_kind():
    try:
        return jax.devices()[0].device_kind.lower()
    except Exception:
        return ""


def _choose_batch_tile(B, is_v7x):
    # Each batch element keeps ~2 x (N*Fp) f32 intermediates (~49 KiB) live plus
    # double-buffered x/out blocks; stay well inside the 32 MiB scoped-VMEM default
    # (v7x: 64 MiB physical vs 128 MiB on v5e/v6e -> smaller cap there).
    cap = 128 if is_v7x else 256
    target = B // 2 if (is_v7x and B % 2 == 0 and B >= 2) else B
    tile = max(1, min(target, cap))
    while B % tile:
        tile -= 1
    return tile


def gc_block_forward(x, kp, *, batch_tile=None):
    """x: (B, N, F) float32 (unpadded). kp: folded/padded params (prepare_kernel_params)."""
    B, N, F = x.shape
    Fp = kp["w1"].shape[1]

    kind = _device_kind()
    is_v7x = "v7" in kind
    if batch_tile is None:
        batch_tile = _choose_batch_tile(B, is_v7x)
    assert B % batch_tile == 0, "batch must be divisible by batch_tile"
    steps = B // batch_tile

    def full(shape):
        return pl.BlockSpec(shape, lambda i, _nd=len(shape): (0,) * _nd)

    in_specs = [
        pl.BlockSpec((batch_tile, N, F), lambda i: (i, 0, 0)),   # x tile (unpadded)
        full((F, Fp)),                                           # w1 (output-dim padded)
        full((N, N)),                                            # att1
        full((2, N, Fp)),                                        # bn1 scale/shift (bias folded)
        full((Fp, Fp)),                                          # w2 (padded)
        full((N, N)),                                            # att2
        full((2, N, Fp)),                                        # bn2 scale/shift (bias folded)
    ]
    out_spec = pl.BlockSpec((batch_tile, N, F), lambda i: (i, 0, 0))

    def call(sem):
        return pl.pallas_call(
            gc_block_kernel,
            out_shape=jax.ShapeDtypeStruct((B, N, F), x.dtype),
            grid=(steps,),
            in_specs=in_specs,
            out_specs=out_spec,
            compiler_params=pltpu.CompilerParams(dimension_semantics=sem),
        )(x, kp["w1"], kp["att1"], kp["bn1"], kp["w2"], kp["att2"], kp["bn2"])

    if steps == 1:
        # Single-TC parts (v5e/v6e): one grid step, no per-step overhead.
        return call(("arbitrary",))
    if is_v7x:
        # v7x: shard the batch axis across the two TensorCores.
        try:
            return call((getattr(pltpu, "CORE_PARALLEL", "parallel"),))
        except Exception:
            pass  # fall back if core-parallel sharding is unsupported in this build
    return call(("parallel",))


def make_raw_params(key, in_features, node_n):
    """Deterministic synthetic parameters mirroring GC_Block.__init__ shapes."""
    F, N = in_features, node_n
    stdv = 1.0 / math.sqrt(F)
    ks = jax.random.split(key, 14)
    u = lambda k, shape: jax.random.uniform(k, shape, jnp.float32, -stdv, stdv)
    return {
        "w1": u(ks[0], (F, F)), "att1": u(ks[1], (N, N)), "b1": u(ks[2], (F,)),
        "w2": u(ks[3], (F, F)), "att2": u(ks[4], (N, N)), "b2": u(ks[5], (F,)),
        "bn1_gamma": 1.0 + 0.1 * jax.random.normal(ks[6], (N * F,), jnp.float32),
        "bn1_beta": 0.1 * jax.random.normal(ks[7], (N * F,), jnp.float32),
        "bn1_mean": 0.1 * jax.random.normal(ks[8], (N * F,), jnp.float32),
        "bn1_var": 1.0 + 0.1 * jax.random.uniform(ks[9], (N * F,), jnp.float32),
        "bn2_gamma": 1.0 + 0.1 * jax.random.normal(ks[10], (N * F,), jnp.float32),
        "bn2_beta": 0.1 * jax.random.normal(ks[11], (N * F,), jnp.float32),
        "bn2_mean": 0.1 * jax.random.normal(ks[12], (N * F,), jnp.float32),
        "bn2_var": 1.0 + 0.1 * jax.random.uniform(ks[13], (N * F,), jnp.float32),
    }


def prepare_kernel_params(raw, node_n, in_features, *, eps=1e-5):
    """Fold BN (running stats) + GC bias into per-(n,f) affines; pad weights offline.

    W1 is padded only on its output dim (F, Fp) so x never needs padding; W2 is
    (Fp, Fp) with zero rows/cols.  Zero-padding the bn affines keeps the padded
    lanes exactly zero, but correctness no longer depends on it: padded lanes are
    sliced off in-kernel before the residual store.
    """
    N, F = node_n, in_features
    Fp = ((F + 127) // 128) * 128

    w1 = jnp.pad(raw["w1"], ((0, 0), (0, Fp - F)))          # (F, Fp)
    w2 = jnp.pad(raw["w2"], ((0, Fp - F), (0, Fp - F)))     # (Fp, Fp)

    def fold_bn(gamma, beta, mean, var, bias):
        scale = gamma / jnp.sqrt(var + eps)                  # (N*F,)
        shift = beta - mean * scale
        scale = scale.reshape(N, F)
        shift = shift.reshape(N, F) + bias[None, :] * scale  # fold GC bias
        pad = ((0, 0), (0, Fp - F))
        return jnp.stack([jnp.pad(scale, pad), jnp.pad(shift, pad)], axis=0)  # (2,N,Fp)

    kp = {
        "w1": w1, "att1": raw["att1"],
        "bn1": fold_bn(raw["bn1_gamma"], raw["bn1_beta"],
                       raw["bn1_mean"], raw["bn1_var"], raw["b1"]),
        "w2": w2, "att2": raw["att2"],
        "bn2": fold_bn(raw["bn2_gamma"], raw["bn2_beta"],
                       raw["bn2_mean"], raw["bn2_var"], raw["b2"]),
    }
    return kp, Fp


def gc_block_reference(x, raw, eps=1e-5):
    """Pure-JAX reference of the same (inference-mode) forward, from raw params."""
    def gc(h, w, att, b):
        support = jnp.einsum("bnf,fg->bng", h, w)
        return jnp.einsum("nm,bmg->bng", att, support) + b[None, None, :]

    def bn(h, gamma, beta, mean, var):
        b_, n_, f_ = h.shape
        hf = h.reshape(b_, n_ * f_)
        hf = (hf - mean) / jnp.sqrt(var + eps) * gamma + beta
        return hf.reshape(b_, n_, f_)

    y = gc(x, raw["w1"], raw["att1"], raw["b1"])
    y = jnp.tanh(bn(y, raw["bn1_gamma"], raw["bn1_beta"], raw["bn1_mean"], raw["bn1_var"]))
    y = gc(y, raw["w2"], raw["att2"], raw["b2"])
    y = jnp.tanh(bn(y, raw["bn2_gamma"], raw["bn2_beta"], raw["bn2_mean"], raw["bn2_var"]))
    return y + x


if __name__ == "__main__":
    B, node_n, in_features = 2, 48, 32
    key = jax.random.PRNGKey(0)
    k_x, k_p = jax.random.split(key)

    x = jax.random.normal(k_x, (B, node_n, in_features), jnp.float32)
    raw = make_raw_params(k_p, in_features, node_n)
    kparams, _ = prepare_kernel_params(raw, node_n, in_features)

    out = gc_block_forward(x, kparams)
    out = jax.block_until_ready(out)

    ref = gc_block_reference(x, raw)
    assert out.shape == (B, node_n, in_features)
    assert jnp.allclose(out, ref, atol=2e-4, rtol=2e-4), "mismatch vs reference"

    print("KERNEL_OK")
</pallas_src>

<mosaic_0001>
module attributes {stable_mosaic.version = 11 : i64} {
  func.func @gc_block_kernel(%arg0: i32, %arg1: memref<2x48x32xf32, #tpu.memory_space<vmem>>, %arg2: memref<32x128xf32, #tpu.memory_space<vmem>>, %arg3: memref<48x48xf32, #tpu.memory_space<vmem>>, %arg4: memref<2x48x128xf32, #tpu.memory_space<vmem>>, %arg5: memref<128x128xf32, #tpu.memory_space<vmem>>, %arg6: memref<48x48xf32, #tpu.memory_space<vmem>>, %arg7: memref<2x48x128xf32, #tpu.memory_space<vmem>>, %arg8: memref<2x48x32xf32, #tpu.memory_space<vmem>>) attributes {dimension_semantics = [#tpu.dimension_semantics<arbitrary>], iteration_bounds = array<i64: 1>, scalar_prefetch = 0 : i64, scratch_operands = 0 : i64, tpu.core_type = #tpu.core_type<tc>, window_params = [{transform_indices = @transform_0, window_bounds = array<i64: 2, 48, 32>}, {pipeline_mode = #tpu.pipeline_mode<synchronous>, transform_indices = @transform_1, window_bounds = array<i64: 32, 128>}, {pipeline_mode = #tpu.pipeline_mode<synchronous>, transform_indices = @transform_2, window_bounds = array<i64: 48, 48>}, {pipeline_mode = #tpu.pipeline_mode<synchronous>, transform_indices = @transform_3, window_bounds = array<i64: 2, 48, 128>}, {pipeline_mode = #tpu.pipeline_mode<synchronous>, transform_indices = @transform_4, window_bounds = array<i64: 128, 128>}, {pipeline_mode = #tpu.pipeline_mode<synchronous>, transform_indices = @transform_5, window_bounds = array<i64: 48, 48>}, {pipeline_mode = #tpu.pipeline_mode<synchronous>, transform_indices = @transform_6, window_bounds = array<i64: 2, 48, 128>}, {transform_indices = @transform_7, window_bounds = array<i64: 2, 48, 32>}]} {
    %c0 = arith.constant 0 : index
    %c0_0 = arith.constant 0 : index
    %c0_1 = arith.constant 0 : index
    %0 = vector.load %arg1[%c0, %c0_0, %c0_1] : memref<2x48x32xf32, #tpu.memory_space<vmem>>, vector<2x48x32xf32>
    %1 = vector.shape_cast %0 : vector<2x48x32xf32> to vector<96x32xf32>
    %c0_2 = arith.constant 0 : index
    %c0_3 = arith.constant 0 : index
    %2 = vector.load %arg2[%c0_2, %c0_3] : memref<32x128xf32, #tpu.memory_space<vmem>>, vector<32x128xf32>
    %cst = arith.constant dense<0.000000e+00> : vector<96x128xf32>
    %3 = tpu.matmul %1, %2, %cst {dimension_numbers = #tpu.dot_dimension_numbers<[1], [0], [0], [1], [0, 0, 1, 1], [], []>} : vector<96x32xf32>, vector<32x128xf32>, vector<96x128xf32> -> vector<96x128xf32>
    %4 = vector.shape_cast %3 : vector<96x128xf32> to vector<2x48x128xf32>
    %c0_4 = arith.constant 0 : index
    %c0_5 = arith.constant 0 : index
    %5 = vector.load %arg3[%c0_4, %c0_5] : memref<48x48xf32, #tpu.memory_space<vmem>>, vector<48x48xf32>
    %6 = vector.shape_cast %5 : vector<48x48xf32> to vector<1x48x48xf32>
    %7 = vector.broadcast %6 : vector<1x48x48xf32> to vector<2x48x48xf32>
    "tpu.trace_start"() <{level = 10 : i32, message = "bnm,bmf->bnf"}> : () -> ()
    %cst_6 = arith.constant dense<0.000000e+00> : vector<2x48x128xf32>
    %8 = tpu.matmul %7, %4, %cst_6 {dimension_numbers = #tpu.dot_dimension_numbers<[2], [1], [1], [2], [0, 0, 0, 1, 1, 2], [0], [0]>} : vector<2x48x48xf32>, vector<2x48x128xf32>, vector<2x48x128xf32> -> vector<2x48x128xf32>
    "tpu.trace_stop"() : () -> ()
    %c0_7 = arith.constant 0 : index
    %c0_8 = arith.constant 0 : index
    %c0_9 = arith.constant 0 : index
    %9 = vector.load %arg4[%c0_7, %c0_8, %c0_9] : memref<2x48x128xf32, #tpu.memory_space<vmem>>, vector<1x48x128xf32>
    %10 = vector.shape_cast %9 : vector<1x48x128xf32> to vector<48x128xf32>
    %11 = vector.shape_cast %10 : vector<48x128xf32> to vector<1x48x128xf32>
    %12 = vector.broadcast %11 : vector<1x48x128xf32> to vector<2x48x128xf32>
    %13 = arith.mulf %8, %12 : vector<2x48x128xf32>
    %c1 = arith.constant 1 : index
    %c0_10 = arith.constant 0 : index
    %c0_11 = arith.constant 0 : index
    %14 = vector.load %arg4[%c1, %c0_10, %c0_11] : memref<2x48x128xf32, #tpu.memory_space<vmem>>, vector<1x48x128xf32>
    %15 = vector.shape_cast %14 : vector<1x48x128xf32> to vector<48x128xf32>
    %16 = vector.shape_cast %15 : vector<48x128xf32> to vector<1x48x128xf32>
    %17 = vector.broadcast %16 : vector<1x48x128xf32> to vector<2x48x128xf32>
    %18 = arith.addf %13, %17 : vector<2x48x128xf32>
    %19 = math.tanh %18 : vector<2x48x128xf32>
    %20 = vector.shape_cast %19 : vector<2x48x128xf32> to vector<96x128xf32>
    %c0_12 = arith.constant 0 : index
    %c0_13 = arith.constant 0 : index
    %21 = vector.load %arg5[%c0_12, %c0_13] : memref<128x128xf32, #tpu.memory_space<vmem>>, vector<128x128xf32>
    %cst_14 = arith.constant dense<0.000000e+00> : vector<96x128xf32>
    %22 = tpu.matmul %20, %21, %cst_14 {dimension_numbers = #tpu.dot_dimension_numbers<[1], [0], [0], [1], [0, 0, 1, 1], [], []>} : vector<96x128xf32>, vector<128x128xf32>, vector<96x128xf32> -> vector<96x128xf32>
    %23 = vector.shape_cast %22 : vector<96x128xf32> to vector<2x48x128xf32>
    %c0_15 = arith.constant 0 : index
    %c0_16 = arith.constant 0 : index
    %24 = vector.load %arg6[%c0_15, %c0_16] : memref<48x48xf32, #tpu.memory_space<vmem>>, vector<48x48xf32>
    %25 = vector.shape_cast %24 : vector<48x48xf32> to vector<1x48x48xf32>
    %26 = vector.broadcast %25 : vector<1x48x48xf32> to vector<2x48x48xf32>
    "tpu.trace_start"() <{level = 10 : i32, message = "bnm,bmf->bnf"}> : () -> ()
    %cst_17 = arith.constant dense<0.000000e+00> : vector<2x48x128xf32>
    %27 = tpu.matmul %26, %23, %cst_17 {dimension_numbers = #tpu.dot_dimension_numbers<[2], [1], [1], [2], [0, 0, 0, 1, 1, 2], [0], [0]>} : vector<2x48x48xf32>, vector<2x48x128xf32>, vector<2x48x128xf32> -> vector<2x48x128xf32>
    "tpu.trace_stop"() : () -> ()
    %c0_18 = arith.constant 0 : index
    %c0_19 = arith.constant 0 : index
    %c0_20 = arith.constant 0 : index
    %28 = vector.load %arg7[%c0_18, %c0_19, %c0_20] : memref<2x48x128xf32, #tpu.memory_space<vmem>>, vector<1x48x128xf32>
    %29 = vector.shape_cast %28 : vector<1x48x128xf32> to vector<48x128xf32>
    %30 = vector.shape_cast %29 : vector<48x128xf32> to vector<1x48x128xf32>
    %31 = vector.broadcast %30 : vector<1x48x128xf32> to vector<2x48x128xf32>
    %32 = arith.mulf %27, %31 : vector<2x48x128xf32>
    %c1_21 = arith.constant 1 : index
    %c0_22 = arith.constant 0 : index
    %c0_23 = arith.constant 0 : index
    %33 = vector.load %arg7[%c1_21, %c0_22, %c0_23] : memref<2x48x128xf32, #tpu.memory_space<vmem>>, vector<1x48x128xf32>
    %34 = vector.shape_cast %33 : vector<1x48x128xf32> to vector<48x128xf32>
    %35 = vector.shape_cast %34 : vector<48x128xf32> to vector<1x48x128xf32>
    %36 = vector.broadcast %35 : vector<1x48x128xf32> to vector<2x48x128xf32>
    %37 = arith.addf %32, %36 : vector<2x48x128xf32>
    %38 = math.tanh %37 : vector<2x48x128xf32>
    %39 = vector.extract_strided_slice %38 {offsets = [0, 0, 0], sizes = [2, 48, 32], strides = [1, 1, 1]} : vector<2x48x128xf32> to vector<2x48x32xf32>
    %c0_24 = arith.constant 0 : index
    %c0_25 = arith.constant 0 : index
    %c0_26 = arith.constant 0 : index
    %40 = vector.load %arg1[%c0_24, %c0_25, %c0_26] : memref<2x48x32xf32, #tpu.memory_space<vmem>>, vector<2x48x32xf32>
    %41 = arith.addf %39, %40 : vector<2x48x32xf32>
    %c0_27 = arith.constant 0 : index
    %c0_28 = arith.constant 0 : index
    %c0_29 = arith.constant 0 : index
    %42 = vector.load %arg8[%c0_27, %c0_28, %c0_29] : memref<2x48x32xf32, #tpu.memory_space<vmem>>, vector<2x48x32xf32>
    tpu.vector_store %arg8[%c0_27, %c0_28, %c0_29], %41 {strides = array<i32>} : memref<2x48x32xf32, #tpu.memory_space<vmem>>, vector<2x48x32xf32>,
    return
  }
  func.func @transform_0(%arg0: i32) -> (i32, i32, i32) {
    %c0_i32 = arith.constant 0 : i32
    %c0_i32_0 = arith.constant 0 : i32
    %c0_i32_1 = arith.constant 0 : i32
    return %arg0, %c0_i32, %c0_i32_0 : i32, i32, i32
  }
  func.func @transform_1(%arg0: i32) -> (i32, i32) {
    %c0_i32 = arith.constant 0 : i32
    %c0_i32_0 = arith.constant 0 : i32
    %c0_i32_1 = arith.constant 0 : i32
    return %c0_i32, %c0_i32_0 : i32, i32
  }
  func.func @transform_2(%arg0: i32) -> (i32, i32) {
    %c0_i32 = arith.constant 0 : i32
    %c0_i32_0 = arith.constant 0 : i32
    %c0_i32_1 = arith.constant 0 : i32
    return %c0_i32, %c0_i32_0 : i32, i32
  }
  func.func @transform_3(%arg0: i32) -> (i32, i32, i32) {
    %c0_i32 = arith.constant 0 : i32
    %c0_i32_0 = arith.constant 0 : i32
    %c0_i32_1 = arith.constant 0 : i32
    %c0_i32_2 = arith.constant 0 : i32
    return %c0_i32, %c0_i32_0, %c0_i32_1 : i32, i32, i32
  }
  func.func @transform_4(%arg0: i32) -> (i32, i32) {
    %c0_i32 = arith.constant 0 : i32
    %c0_i32_0 = arith.constant 0 : i32
    %c0_i32_1 = arith.constant 0 : i32
    return %c0_i32, %c0_i32_0 : i32, i32
  }
  func.func @transform_5(%arg0: i32) -> (i32, i32) {
    %c0_i32 = arith.constant 0 : i32
    %c0_i32_0 = arith.constant 0 : i32
    %c0_i32_1 = arith.constant 0 : i32
    return %c0_i32, %c0_i32_0 : i32, i32
  }
  func.func @transform_6(%arg0: i32) -> (i32, i32, i32) {
    %c0_i32 = arith.constant 0 : i32
    %c0_i32_0 = arith.constant 0 : i32
    %c0_i32_1 = arith.constant 0 : i32
    %c0_i32_2 = arith.constant 0 : i32
    return %c0_i32, %c0_i32_0, %c0_i32_1 : i32, i32, i32
  }
  func.func @transform_7(%arg0: i32) -> (i32, i32, i32) {
    %c0_i32 = arith.constant 0 : i32
    %c0_i32_0 = arith.constant 0 : i32
    %c0_i32_1 = arith.constant 0 : i32
    return %arg0, %c0_i32, %c0_i32_0 : i32, i32, i32
  }
}

</mosaic_0001>

<llo_original>
// kernel: tpu_custom_call.1
$region0: #{tpu_custom_call.1}
  #allocation0 [shape = 'u32[]', space=smem, size = 0x4, offset = 0x4, fixed_abs, tag = 'smem constant byte address 0x4 - core index']
  #allocation1 [shape = 'u32[144,128]{1,0:T(1,128)}', space=vmem, size = 0x12000, scoped, tag = 'internal scratch']
  %s0 = inlined_call_operand.vmem [shape: f32[2,48,32], index: 0, kind: input, shape index: {}]
  %s1 = inlined_call_operand.hbm [shape: f32[32,128], index: 1, kind: input, shape index: {}]
  %s2 = inlined_call_operand.hbm [shape: f32[48,48], index: 2, kind: input, shape index: {}]
  %s3 = inlined_call_operand.hbm [shape: f32[2,48,128], index: 3, kind: input, shape index: {}]
  %s4 = inlined_call_operand.vmem [shape: f32[128,128], index: 4, kind: input, shape index: {}]
  %s5 = inlined_call_operand.vmem [shape: f32[48,48], index: 5, kind: input, shape index: {}]
  %s6 = inlined_call_operand.hbm [shape: f32[2,48,128], index: 6, kind: input, shape index: {}]
  %s7 = inlined_call_operand.vmem [shape: f32[2,48,32], index: 7, kind: output, shape index: {}]
  %s8 = sld [smem:[#allocation0]]
  $region54: #{tpu_custom_call.1} parent=0
    _
  %s10 = ssub.s32 1, %s8
  %s11 = scalar_select 0, %s10, %s8
  $region1: #{tpu_custom_call.1} parent=0
    #allocation2 [shape = 'u8[16384]{0}', space=vmem, size = 0x4000, scoped, tag = 'input window, operand 1, single buffered']
    #allocation3 [shape = 's32[1]{0}', space=sflag, size = 0x4, scoped, tag = 'scoped memory for tpu_custom_call.1']
    #allocation4 [shape = 'u8[24576]{0}', space=vmem, size = 0x6000, scoped, tag = 'input window, operand 2, single buffered']
    #allocation5 [shape = 's32[1]{0}', space=sflag, size = 0x4, scoped, tag = 'scoped memory for tpu_custom_call.1']
    #allocation6 [shape = 'u8[49152]{0}', space=vmem, size = 0xc000, scoped, tag = 'input window, operand 3, single buffered']
    #allocation7 [shape = 'u8[49152]{0}', space=vmem, size = 0xc000, scoped, tag = 'input window, operand 6, single buffered']
    #allocation8 [shape = 's32[1]{0}', space=sflag, size = 0x4, scoped, tag = 'scoped memory for tpu_custom_call.1']
    %12 = vsyncpa [#allocation3], 0
    %13 = vsyncpa [#allocation5], 0
    %14 = vsyncpa [#allocation8], 0
    // Predicated region
    $region2: #{tpu_custom_call.1} parent=1 // pred_check
      _
    $region3: #{tpu_custom_call.1} parent=1 // pred_check_branch
      %16 = sbr.rel (0) target = $region5
    $region4: #{tpu_custom_call.1} parent=1 // pred_region
      _
    $region5: #{tpu_custom_call.1} parent=1 // pred_fallthru
      _
    // Predicated region
    $region6: #{tpu_custom_call.1} parent=1 // pred_check
      _
    $region7: #{tpu_custom_call.1} parent=1 // pred_check_branch
      %18 = sbr.rel (0) target = $region9
    $region8: #{tpu_custom_call.1} parent=1 // pred_region
      %s20 = ssub.s32 512, 512
      %21 = vsyncadd [#allocation3], %s20
      %s22 = sshll.u32 [#allocation2], 4
      %s23 = int_to_ptr.vmem [resolvable:$true] %s22
      %28 = dma.hbm_to_vmem [thread:$0]  %s1, 512, %s23, [#allocation3], 128, 128, 8
    $region9: #{tpu_custom_call.1} parent=1 // pred_fallthru
      _
    // Predicated region
    $region10: #{tpu_custom_call.1} parent=1 // pred_check
      _
    $region11: #{tpu_custom_call.1} parent=1 // pred_check_branch
      %30 = sbr.rel (0) target = $region13
    $region12: #{tpu_custom_call.1} parent=1 // pred_region
      %s32 = ssub.s32 768, 768
      %33 = vsyncadd [#allocation5], %s32
      %s34 = sshll.u32 [#allocation4], 4
      %s35 = int_to_ptr.vmem [resolvable:$true] %s34
      %40 = dma.hbm_to_vmem [thread:$0]  %s2, 768, %s35, [#allocation5], 128, 128, 8
    $region13: #{tpu_custom_call.1} parent=1 // pred_fallthru
      _
    // Predicated region
    $region14: #{tpu_custom_call.1} parent=1 // pred_check
      _
    $region15: #{tpu_custom_call.1} parent=1 // pred_check_branch
      %42 = sbr.rel (0) target = $region17
    $region16: #{tpu_custom_call.1} parent=1 // pred_region
      %s44 = ssub.s32 1536, 1536
      %45 = vsyncadd [#allocation5], %s44
      %s46 = sshll.u32 [#allocation6], 4
      %s47 = int_to_ptr.vmem [resolvable:$true] %s46
      %52 = dma.hbm_to_vmem [thread:$0]  %s3, 1536, %s47, [#allocation5], 128, 128, 8
    $region17: #{tpu_custom_call.1} parent=1 // pred_fallthru
      _
    // Predicated region
    $region18: #{tpu_custom_call.1} parent=1 // pred_check
      _
    $region19: #{tpu_custom_call.1} parent=1 // pred_check_branch
      %54 = sbr.rel (0) target = $region21
    $region20: #{tpu_custom_call.1} parent=1 // pred_region
      _
    $region21: #{tpu_custom_call.1} parent=1 // pred_fallthru
      _
    // Predicated region
    $region22: #{tpu_custom_call.1} parent=1 // pred_check
      _
    $region23: #{tpu_custom_call.1} parent=1 // pred_check_branch
      %56 = sbr.rel (0) target = $region25
    $region24: #{tpu_custom_call.1} parent=1 // pred_region
      _
    $region25: #{tpu_custom_call.1} parent=1 // pred_fallthru
      _
    // Predicated region
    $region26: #{tpu_custom_call.1} parent=1 // pred_check
      _
    $region27: #{tpu_custom_call.1} parent=1 // pred_check_branch
      %58 = sbr.rel (0) target = $region29
    $region28: #{tpu_custom_call.1} parent=1 // pred_region
      %s60 = ssub.s32 1536, 1536
      %61 = vsyncadd [#allocation8], %s60
      %s62 = sshll.u32 [#allocation7], 4
      %s63 = int_to_ptr.vmem [resolvable:$true] %s62
      %68 = dma.hbm_to_vmem [thread:$0]  %s6, 1536, %s63, [#allocation8], 128, 128, 8
    $region29: #{tpu_custom_call.1} parent=1 // pred_fallthru
      _
    // Predicated region
    $region30: #{tpu_custom_call.1} parent=1 // pred_check
      _
    $region31: #{tpu_custom_call.1} parent=1 // pred_check_branch
      %70 = sbr.rel (0) target = $region33
    $region32: #{tpu_custom_call.1} parent=1 // pred_region
      %71 = dma.done [#allocation3], 512
    $region33: #{tpu_custom_call.1} parent=1 // pred_fallthru
      _
    // Predicated region
    $region34: #{tpu_custom_call.1} parent=1 // pred_check
      _
    $region35: #{tpu_custom_call.1} parent=1 // pred_check_branch
      %73 = sbr.rel (0) target = $region37
    $region36: #{tpu_custom_call.1} parent=1 // pred_region
      %74 = dma.done [#allocation5], 768
    $region37: #{tpu_custom_call.1} parent=1 // pred_fallthru
      _
    // Predicated region
    $region38: #{tpu_custom_call.1} parent=1 // pred_check
      _
    $region39: #{tpu_custom_call.1} parent=1 // pred_check_branch
      %76 = sbr.rel (0) target = $region41
    $region40: #{tpu_custom_call.1} parent=1 // pred_region
      %77 = dma.done [#allocation5], 1536
    $region41: #{tpu_custom_call.1} parent=1 // pred_fallthru
      _
    // Predicated region
    $region42: #{tpu_custom_call.1} parent=1 // pred_check
      _
    $region43: #{tpu_custom_call.1} parent=1 // pred_check_branch
      %79 = sbr.rel (0) target = $region45
    $region44: #{tpu_custom_call.1} parent=1 // pred_region
      %80 = dma.done [#allocation8], 1536
    $region45: #{tpu_custom_call.1} parent=1 // pred_fallthru
      _
    %v81 = vld [vmem:[%s0] sm:$0xff]
    %v82 = vld [vmem:[%s0 + $0x8] sm:$0xff]
    %v83 = vld [vmem:[%s0 + $0x10] sm:$0xff]
    %v84 = vld [vmem:[%s0 + $0x18] sm:$0xff]
    %v85 = vld [vmem:[%s0 + $0x20] sm:$0xff]
    %v86 = vld [vmem:[%s0 + $0x28] sm:$0xff]
    %v87 = vld [vmem:[%s0 + $0x30] sm:$0xff]
    %v88 = vld [vmem:[%s0 + $0x38] sm:$0xff]
    %v89 = vld [vmem:[%s0 + $0x40] sm:$0xff]
    %v90 = vld [vmem:[%s0 + $0x48] sm:$0xff]
    %v91 = vld [vmem:[%s0 + $0x50] sm:$0xff]
    %v92 = vld [vmem:[%s0 + $0x58] sm:$0xff]
    %v93 = vld [vmem:[#allocation2] sm:$0xff]
    %v94 = vld [vmem:[#allocation2 + $0x8] sm:$0xff]
    %v95 = vld [vmem:[#allocation2 + $0x10] sm:$0xff]
    %v96 = vld [vmem:[#allocation2 + $0x18] sm:$0xff]
    %vm97 = vcmask 261120
    %v99 = vsel %vm97, %v81, 0
    %v102 = vsel %vm97, %v82, 0
    %v105 = vsel %vm97, %v83, 0
    %v108 = vsel %vm97, %v84, 0
    %v111 = vsel %vm97, %v85, 0
    %v114 = vsel %vm97, %v86, 0
    %v117 = vsel %vm97, %v87, 0
    %v120 = vsel %vm97, %v88, 0
    %v123 = vsel %vm97, %v89, 0
    %v126 = vsel %vm97, %v90, 0
    %v129 = vsel %vm97, %v91, 0
    %v132 = vsel %vm97, %v92, 0
    %134 = vmatprep.subr.mxu0 0.0
    %135 = vmatpush1.msra.mxu0 %v93
    %136 = vmatprep.subr.mxu0 0.0
    %137 = vmatpush1.msra.mxu0 %v94
    %138 = vmatprep.subr.mxu0 0.0
    %139 = vmatpush1.msra.mxu0 %v95
    %140 = vmatprep.subr.mxu0 0.0
    %141 = vmatpush1.msra.mxu0 %v96
    %142 = vmatprep.subr.mxu0 0.0
    %143 = vmatpush1.msra.mxu0 0.0
    %144 = vmatprep.subr.mxu0 0.0
    %145 = vmatpush1.msra.mxu0 0.0
    %146 = vmatprep.subr.mxu0 0.0
    %147 = vmatpush1.msra.mxu0 0.0
    %148 = vmatprep.subr.mxu0 0.0
    %149 = vmatpush1.msra.mxu0 0.0
    %150 = vmatprep.subr.mxu0 0.0
    %151 = vmatpush1.msra.mxu0 0.0
    %152 = vmatprep.subr.mxu0 0.0
    %153 = vmatpush1.msra.mxu0 0.0
    %154 = vmatprep.subr.mxu0 0.0
    %155 = vmatpush1.msra.mxu0 0.0
    %156 = vmatprep.subr.mxu0 0.0
    %157 = vmatpush1.msra.mxu0 0.0
    %158 = vmatprep.subr.mxu0 0.0
    %159 = vmatpush1.msra.mxu0 0.0
    %160 = vmatprep.subr.mxu0 0.0
    %161 = vmatpush1.msra.mxu0 0.0
    %162 = vmatprep.subr.mxu0 0.0
    %163 = vmatpush1.msra.mxu0 0.0
    %164 = vmatprep.subr.mxu0 0.0
    %165 = vmatpush1.msra.mxu0 0.0
    %166 = vmatprep.subr.mxu0 0.0
    %167 = vmatpush1.msra.mxu0 0.0
    %168 = vmatprep.subr.mxu0 0.0
    %169 = vmatpush1.msra.mxu0 0.0
    %170 = vmatprep.subr.mxu0 0.0
    %171 = vmatpush1.msra.mxu0 0.0
    %172 = vmatprep.subr.mxu0 0.0
    %173 = vmatpush1.msra.mxu0 0.0
    %174 = vmatprep.subr.mxu0 0.0
    %175 = vmatpush1.msra.mxu0 0.0
    %176 = vmatprep.subr.mxu0 0.0
    %177 = vmatpush1.msra.mxu0 0.0
    %178 = vmatprep.subr.mxu0 0.0
    %179 = vmatpush1.msra.mxu0 0.0
    %180 = vmatprep.subr.mxu0 0.0
    %181 = vmatpush1.msra.mxu0 0.0
    %182 = vmatprep.subr.mxu0 0.0
    %183 = vmatpush1.msra.mxu0 0.0
    %184 = vmatprep.subr.mxu0 0.0
    %185 = vmatpush1.msra.mxu0 0.0
    %186 = vmatprep.subr.mxu0 0.0
    %187 = vmatpush1.msra.mxu0 0.0
    %188 = vmatprep.subr.mxu0 0.0
    %189 = vmatpush1.msra.mxu0 0.0
    %190 = vmatprep.subr.mxu0 0.0
    %191 = vmatpush1.msra.mxu0 0.0
    %192 = vmatprep.subr.mxu0 0.0
    %193 = vmatpush1.msra.mxu0 0.0
    %194 = vmatprep.subr.mxu0 0.0
    %195 = vmatpush1.msra.mxu0 0.0
    %196 = vmatprep.subr.mxu0 0.0
    %197 = vmatpush1.msra.mxu0 0.0
    %198 = vmatprep.mubr.f32.mxu0 0.0
    %199 = vmatmul.mubr.f32.gmra.mrb[0].mxu0 %v99
    %v200 = vpop.f32.mrb[0].mxu0
    %v201 = vadd.f32 0.0, %v200
    %v202 = vpop.f32.mrb[0].mxu0
    %203 = vmatprep.mubr.f32.mxu0 0.0
    %204 = vmatmul.mubr.f32.gmra.mrb[0].mxu0 %v102
    %v205 = vpop.f32.mrb[0].mxu0
    %v206 = vadd.f32 0.0, %v205
    %v207 = vpop.f32.mrb[0].mxu0
    %208 = vmatprep.mubr.f32.mxu0 0.0
    %209 = vmatmul.mubr.f32.gmra.mrb[0].mxu0 %v105
    %v210 = vpop.f32.mrb[0].mxu0
    %v211 = vadd.f32 0.0, %v210
    %v212 = vpop.f32.mrb[0].mxu0
    %213 = vmatprep.mubr.f32.mxu0 0.0
    %214 = vmatmul.mubr.f32.gmra.mrb[0].mxu0 %v108
    %v215 = vpop.f32.mrb[0].mxu0
    %v216 = vadd.f32 0.0, %v215
    %v217 = vpop.f32.mrb[0].mxu0
    %218 = vmatprep.mubr.f32.mxu0 0.0
    %219 = vmatmul.mubr.f32.gmra.mrb[0].mxu0 %v111
    %v220 = vpop.f32.mrb[0].mxu0
    %v221 = vadd.f32 0.0, %v220
    %v222 = vpop.f32.mrb[0].mxu0
    %223 = vmatprep.mubr.f32.mxu0 0.0
    %224 = vmatmul.mubr.f32.gmra.mrb[0].mxu0 %v114
    %v225 = vpop.f32.mrb[0].mxu0
    %v226 = vadd.f32 0.0, %v225
    %v227 = vpop.f32.mrb[0].mxu0
    %228 = vmatprep.mubr.f32.mxu0 0.0
    %229 = vmatmul.mubr.f32.gmra.mrb[0].mxu0 %v117
    %v230 = vpop.f32.mrb[0].mxu0
    %v231 = vadd.f32 0.0, %v230
    %v232 = vpop.f32.mrb[0].mxu0
    %233 = vmatprep.mubr.f32.mxu0 0.0
    %234 = vmatmul.mubr.f32.gmra.mrb[0].mxu0 %v120
    %v235 = vpop.f32.mrb[0].mxu0
    %v236 = vadd.f32 0.0, %v235
    %v237 = vpop.f32.mrb[0].mxu0
    %238 = vmatprep.mubr.f32.mxu0 0.0
    %239 = vmatmul.mubr.f32.gmra.mrb[0].mxu0 %v123
    %v240 = vpop.f32.mrb[0].mxu0
    %v241 = vadd.f32 0.0, %v240
    %v242 = vpop.f32.mrb[0].mxu0
    %243 = vmatprep.mubr.f32.mxu0 0.0
    %244 = vmatmul.mubr.f32.gmra.mrb[0].mxu0 %v126
    %v245 = vpop.f32.mrb[0].mxu0
    %v246 = vadd.f32 0.0, %v245
    %v247 = vpop.f32.mrb[0].mxu0
    %248 = vmatprep.mubr.f32.mxu0 0.0
    %249 = vmatmul.mubr.f32.gmra.mrb[0].mxu0 %v129
    %v250 = vpop.f32.mrb[0].mxu0
    %v251 = vadd.f32 0.0, %v250
    %v252 = vpop.f32.mrb[0].mxu0
    %253 = vmatprep.mubr.f32.mxu0 0.0
    %254 = vmatmul.mubr.f32.gmra.mrb[0].mxu0 %v132
    %v255 = vpop.f32.mrb[0].mxu0
    %v256 = vadd.f32 0.0, %v255
    %v257 = vpop.f32.mrb[0].mxu0
    %258 = vdwg.mxu0
    %v259 = vld [vmem:[#allocation4] sm:$0xff]
    %v260 = vld [vmem:[#allocation4 + $0x8] sm:$0xff]
    %v261 = vld [vmem:[#allocation4 + $0x10] sm:$0xff]
    %v262 = vld [vmem:[#allocation4 + $0x18] sm:$0xff]
    %v263 = vld [vmem:[#allocation4 + $0x20] sm:$0xff]
    %v264 = vld [vmem:[#allocation4 + $0x28] sm:$0xff]
    %vm265 = vcmask 392192
    %v267 = vsel %vm265, %v259, 0
    %v270 = vsel %vm265, %v260, 0
    %v273 = vsel %vm265, %v261, 0
    %v276 = vsel %vm265, %v262, 0
    %v279 = vsel %vm265, %v263, 0
    %v282 = vsel %vm265, %v264, 0
    %284 = vmatprep.subr.mxu0 0.0
    %285 = vmatpush1.msra.mxu0 %v201
    %286 = vmatprep.subr.mxu0 0.0
    %287 = vmatpush1.msra.mxu0 %v206
    %288 = vmatprep.subr.mxu0 0.0
    %289 = vmatpush1.msra.mxu0 %v211
    %290 = vmatprep.subr.mxu0 0.0
    %291 = vmatpush1.msra.mxu0 %v216
    %292 = vmatprep.subr.mxu0 0.0
    %293 = vmatpush1.msra.mxu0 %v221
    %294 = vmatprep.subr.mxu0 0.0
    %295 = vmatpush1.msra.mxu0 %v226
    %296 = vmatprep.subr.mxu0 0.0
    %297 = vmatpush1.msra.mxu0 0.0
    %298 = vmatprep.subr.mxu0 0.0
    %299 = vmatpush1.msra.mxu0 0.0
    %300 = vmatprep.subr.mxu0 0.0
    %301 = vmatpush1.msra.mxu0 0.0
    %302 = vmatprep.subr.mxu0 0.0
    %303 = vmatpush1.msra.mxu0 0.0
    %304 = vmatprep.subr.mxu0 0.0
    %305 = vmatpush1.msra.mxu0 0.0
    %306 = vmatprep.subr.mxu0 0.0
    %307 = vmatpush1.msra.mxu0 0.0
    %308 = vmatprep.subr.mxu0 0.0
    %309 = vmatpush1.msra.mxu0 0.0
    %310 = vmatprep.subr.mxu0 0.0
    %311 = vmatpush1.msra.mxu0 0.0
    %312 = vmatprep.subr.mxu0 0.0
    %313 = vmatpush1.msra.mxu0 0.0
    %314 = vmatprep.subr.mxu0 0.0
    %315 = vmatpush1.msra.mxu0 0.0
    %316 = vmatprep.subr.mxu0 0.0
    %317 = vmatpush1.msra.mxu0 0.0
    %318 = vmatprep.subr.mxu0 0.0
    %319 = vmatpush1.msra.mxu0 0.0
    %320 = vmatprep.subr.mxu0 0.0
    %321 = vmatpush1.msra.mxu0 0.0
    %322 = vmatprep.subr.mxu0 0.0
    %323 = vmatpush1.msra.mxu0 0.0
    %324 = vmatprep.subr.mxu0 0.0
    %325 = vmatpush1.msra.mxu0 0.0
    %326 = vmatprep.subr.mxu0 0.0
    %327 = vmatpush1.msra.mxu0 0.0
    %328 = vmatprep.subr.mxu0 0.0
    %329 = vmatpush1.msra.mxu0 0.0
    %330 = vmatprep.subr.mxu0 0.0
    %331 = vmatpush1.msra.mxu0 0.0
    %332 = vmatprep.subr.mxu0 0.0
    %333 = vmatpush1.msra.mxu0 0.0
    %334 = vmatprep.subr.mxu0 0.0
    %335 = vmatpush1.msra.mxu0 0.0
    %336 = vmatprep.subr.mxu0 0.0
    %337 = vmatpush1.msra.mxu0 0.0
    %338 = vmatprep.subr.mxu0 0.0
    %339 = vmatpush1.msra.mxu0 0.0
    %340 = vmatprep.subr.mxu0 0.0
    %341 = vmatpush1.msra.mxu0 0.0
    %342 = vmatprep.subr.mxu0 0.0
    %343 = vmatpush1.msra.mxu0 0.0
    %344 = vmatprep.subr.mxu0 0.0
    %345 = vmatpush1.msra.mxu0 0.0
    %346 = vmatprep.subr.mxu0 0.0
    %347 = vmatpush1.msra.mxu0 0.0
    %348 = vmatprep.mubr.f32.mxu0 0.0
    %349 = vmatmul.mubr.f32.gmra.mrb[0].mxu0 %v267
    %v350 = vpop.f32.mrb[0].mxu0
    %v351 = vadd.f32 0.0, %v350
    %v352 = vpop.f32.mrb[0].mxu0
    %353 = vmatprep.mubr.f32.mxu0 0.0
    %354 = vmatmul.mubr.f32.gmra.mrb[0].mxu0 %v270
    %v355 = vpop.f32.mrb[0].mxu0
    %v356 = vadd.f32 0.0, %v355
    %v357 = vpop.f32.mrb[0].mxu0
    %358 = vmatprep.mubr.f32.mxu0 0.0
    %359 = vmatmul.mubr.f32.gmra.mrb[0].mxu0 %v273
    %v360 = vpop.f32.mrb[0].mxu0
    %v361 = vadd.f32 0.0, %v360
    %v362 = vpop.f32.mrb[0].mxu0
    %363 = vmatprep.mubr.f32.mxu0 0.0
    %364 = vmatmul.mubr.f32.gmra.mrb[0].mxu0 %v276
    %v365 = vpop.f32.mrb[0].mxu0
    %v366 = vadd.f32 0.0, %v365
    %v367 = vpop.f32.mrb[0].mxu0
    %368 = vmatprep.mubr.f32.mxu0 0.0
    %369 = vmatmul.mubr.f32.gmra.mrb[0].mxu0 %v279
    %v370 = vpop.f32.mrb[0].mxu0
    %v371 = vadd.f32 0.0, %v370
    %v372 = vpop.f32.mrb[0].mxu0
    %373 = vmatprep.mubr.f32.mxu0 0.0
    %374 = vmatmul.mubr.f32.gmra.mrb[0].mxu0 %v282
    %v375 = vpop.f32.mrb[0].mxu0
    %v376 = vadd.f32 0.0, %v375
    %v377 = vpop.f32.mrb[0].mxu0
    %378 = vdwg.mxu0
    %379 = vmatprep.subr.mxu0 0.0
    %380 = vmatpush1.msra.mxu0 %v231
    %381 = vmatprep.subr.mxu0 0.0
    %382 = vmatpush1.msra.mxu0 %v236
    %383 = vmatprep.subr.mxu0 0.0
    %384 = vmatpush1.msra.mxu0 %v241
    %385 = vmatprep.subr.mxu0 0.0
    %386 = vmatpush1.msra.mxu0 %v246
    %387 = vmatprep.subr.mxu0 0.0
    %388 = vmatpush1.msra.mxu0 %v251
    %389 = vmatprep.subr.mxu0 0.0
    %390 = vmatpush1.msra.mxu0 %v256
    %391 = vmatprep.subr.mxu0 0.0
    %392 = vmatpush1.msra.mxu0 0.0
    %393 = vmatprep.subr.mxu0 0.0
    %394 = vmatpush1.msra.mxu0 0.0
    %395 = vmatprep.subr.mxu0 0.0
    %396 = vmatpush1.msra.mxu0 0.0
    %397 = vmatprep.subr.mxu0 0.0
    %398 = vmatpush1.msra.mxu0 0.0
    %399 = vmatprep.subr.mxu0 0.0
    %400 = vmatpush1.msra.mxu0 0.0
    %401 = vmatprep.subr.mxu0 0.0
    %402 = vmatpush1.msra.mxu0 0.0
    %403 = vmatprep.subr.mxu0 0.0
    %404 = vmatpush1.msra.mxu0 0.0
    %405 = vmatprep.subr.mxu0 0.0
    %406 = vmatpush1.msra.mxu0 0.0
    %407 = vmatprep.subr.mxu0 0.0
    %408 = vmatpush1.msra.mxu0 0.0
    %409 = vmatprep.subr.mxu0 0.0
    %410 = vmatpush1.msra.mxu0 0.0
    %411 = vmatprep.subr.mxu0 0.0
    %412 = vmatpush1.msra.mxu0 0.0
    %413 = vmatprep.subr.mxu0 0.0
    %414 = vmatpush1.msra.mxu0 0.0
    %415 = vmatprep.subr.mxu0 0.0
    %416 = vmatpush1.msra.mxu0 0.0
    %417 = vmatprep.subr.mxu0 0.0
    %418 = vmatpush1.msra.mxu0 0.0
    %419 = vmatprep.subr.mxu0 0.0
    %420 = vmatpush1.msra.mxu0 0.0
    %421 = vmatprep.subr.mxu0 0.0
    %422 = vmatpush1.msra.mxu0 0.0
    %423 = vmatprep.subr.mxu0 0.0
    %424 = vmatpush1.msra.mxu0 0.0
    %425 = vmatprep.subr.mxu0 0.0
    %426 = vmatpush1.msra.mxu0 0.0
    %427 = vmatprep.subr.mxu0 0.0
    %428 = vmatpush1.msra.mxu0 0.0
    %429 = vmatprep.subr.mxu0 0.0
    %430 = vmatpush1.msra.mxu0 0.0
    %431 = vmatprep.subr.mxu0 0.0
    %432 = vmatpush1.msra.mxu0 0.0
    %433 = vmatprep.subr.mxu0 0.0
    %434 = vmatpush1.msra.mxu0 0.0
    %435 = vmatprep.subr.mxu0 0.0
    %436 = vmatpush1.msra.mxu0 0.0
    %437 = vmatprep.subr.mxu0 0.0
    %438 = vmatpush1.msra.mxu0 0.0
    %439 = vmatprep.subr.mxu0 0.0
    %440 = vmatpush1.msra.mxu0 0.0
    %441 = vmatprep.subr.mxu0 0.0
    %442 = vmatpush1.msra.mxu0 0.0
    %443 = vmatprep.mubr.f32.mxu0 0.0
    %444 = vmatmul.mubr.f32.gmra.mrb[0].mxu0 %v267
    %v445 = vpop.f32.mrb[0].mxu0
    %v446 = vadd.f32 0.0, %v445
    %v447 = vpop.f32.mrb[0].mxu0
    %448 = vmatprep.mubr.f32.mxu0 0.0
    %449 = vmatmul.mubr.f32.gmra.mrb[0].mxu0 %v270
    %v450 = vpop.f32.mrb[0].mxu0
    %v451 = vadd.f32 0.0, %v450
    %v452 = vpop.f32.mrb[0].mxu0
    %453 = vmatprep.mubr.f32.mxu0 0.0
    %454 = vmatmul.mubr.f32.gmra.mrb[0].mxu0 %v273
    %v455 = vpop.f32.mrb[0].mxu0
    %v456 = vadd.f32 0.0, %v455
    %v457 = vpop.f32.mrb[0].mxu0
    %458 = vmatprep.mubr.f32.mxu0 0.0
    %459 = vmatmul.mubr.f32.gmra.mrb[0].mxu0 %v276
    %v460 = vpop.f32.mrb[0].mxu0
    %v461 = vadd.f32 0.0, %v460
    %v462 = vpop.f32.mrb[0].mxu0
    %463 = vmatprep.mubr.f32.mxu0 0.0
    %464 = vmatmul.mubr.f32.gmra.mrb[0].mxu0 %v279
    %v465 = vpop.f32.mrb[0].mxu0
    %v466 = vadd.f32 0.0, %v465
    %v467 = vpop.f32.mrb[0].mxu0
    %468 = vmatprep.mubr.f32.mxu0 0.0
    %469 = vmatmul.mubr.f32.gmra.mrb[0].mxu0 %v282
    %v470 = vpop.f32.mrb[0].mxu0
    %v471 = vadd.f32 0.0, %v470
    %v472 = vpop.f32.mrb[0].mxu0
    %473 = vdwg.mxu0
    %v474 = vld [vmem:[#allocation6] sm:$0xff]
    %v475 = vld [vmem:[#allocation6 + $0x8] sm:$0xff]
    %v476 = vld [vmem:[#allocation6 + $0x10] sm:$0xff]
    %v477 = vld [vmem:[#allocation6 + $0x18] sm:$0xff]
    %v478 = vld [vmem:[#allocation6 + $0x20] sm:$0xff]
    %v479 = vld [vmem:[#allocation6 + $0x28] sm:$0xff]
    %v480 = vmul.f32 %v351, %v474
    %v481 = vmul.f32 %v356, %v475
    %v482 = vmul.f32 %v361, %v476
    %v483 = vmul.f32 %v366, %v477
    %v484 = vmul.f32 %v371, %v478
    %v485 = vmul.f32 %v376, %v479
    %v486 = vmul.f32 %v446, %v474
    %v487 = vmul.f32 %v451, %v475
    %v488 = vmul.f32 %v456, %v476
    %v489 = vmul.f32 %v461, %v477
    %v490 = vmul.f32 %v466, %v478
    %v491 = vmul.f32 %v471, %v479
    %s492 = scalar_lea.vmem [#allocation6], 48
    %v493 = vld [vmem:[%s492] sm:$0xff]
    %v494 = vld [vmem:[%s492 + $0x8] sm:$0xff]
    %v495 = vld [vmem:[%s492 + $0x10] sm:$0xff]
    %v496 = vld [vmem:[%s492 + $0x18] sm:$0xff]
    %v497 = vld [vmem:[%s492 + $0x20] sm:$0xff]
    %v498 = vld [vmem:[%s492 + $0x28] sm:$0xff]
    %v499 = vadd.f32 %v480, %v493
    %v500 = vadd.f32 %v481, %v494
    %v501 = vadd.f32 %v482, %v495
    %v502 = vadd.f32 %v483, %v496
    %v503 = vadd.f32 %v484, %v497
    %v504 = vadd.f32 %v485, %v498
    %v505 = vadd.f32 %v486, %v493
    %v506 = vadd.f32 %v487, %v494
    %v507 = vadd.f32 %v488, %v495
    %v508 = vadd.f32 %v489, %v496
    %v509 = vadd.f32 %v490, %v497
    %v510 = vadd.f32 %v491, %v498
    %v511 = vtanh.pop %v499
    %v512 = vtanh.pop %v500
    %v513 = vtanh.pop %v501
    %v514 = vtanh.pop %v502
    %v515 = vtanh.pop %v503
    %v516 = vtanh.pop %v504
    %v517 = vtanh.pop %v505
    %v518 = vtanh.pop %v506
    %v519 = vtanh.pop %v507
    %v520 = vtanh.pop %v508
    %v521 = vtanh.pop %v509
    %v522 = vtanh.pop %v510
    %v523 = vld [vmem:[%s4] sm:$0xff]
    %v524 = vld [vmem:[%s4 + $0x8] sm:$0xff]
    %v525 = vld [vmem:[%s4 + $0x10] sm:$0xff]
    %v526 = vld [vmem:[%s4 + $0x18] sm:$0xff]
    %v527 = vld [vmem:[%s4 + $0x20] sm:$0xff]
    %v528 = vld [vmem:[%s4 + $0x28] sm:$0xff]
    %v529 = vld [vmem:[%s4 + $0x30] sm:$0xff]
    %v530 = vld [vmem:[%s4 + $0x38] sm:$0xff]
    %v531 = vld [vmem:[%s4 + $0x40] sm:$0xff]
    %v532 = vld [vmem:[%s4 + $0x48] sm:$0xff]
    %v533 = vld [vmem:[%s4 + $0x50] sm:$0xff]
    %v534 = vld [vmem:[%s4 + $0x58] sm:$0xff]
    %v535 = vld [vmem:[%s4 + $0x60] sm:$0xff]
    %v536 = vld [vmem:[%s4 + $0x68] sm:$0xff]
    %v537 = vld [vmem:[%s4 + $0x70] sm:$0xff]
    %v538 = vld [vmem:[%s4 + $0x78] sm:$0xff]
    %539 = vmatprep.subr.mxu0 0.0
    %540 = vmatpush1.msra.mxu0 %v523
    %541 = vmatprep.subr.mxu0 0.0
    %542 = vmatpush1.msra.mxu0 %v524
    %543 = vmatprep.subr.mxu0 0.0
    %544 = vmatpush1.msra.mxu0 %v525
    %545 = vmatprep.subr.mxu0 0.0
    %546 = vmatpush1.msra.mxu0 %v526
    %547 = vmatprep.subr.mxu0 0.0
    %548 = vmatpush1.msra.mxu0 %v527
    %549 = vmatprep.subr.mxu0 0.0
    %550 = vmatpush1.msra.mxu0 %v528
    %551 = vmatprep.subr.mxu0 0.0
    %552 = vmatpush1.msra.mxu0 %v529
    %553 = vmatprep.subr.mxu0 0.0
    %554 = vmatpush1.msra.mxu0 %v530
    %555 = vmatprep.subr.mxu0 0.0
    %556 = vmatpush1.msra.mxu0 %v531
    %557 = vmatprep.subr.mxu0 0.0
    %558 = vmatpush1.msra.mxu0 %v532
    %559 = vmatprep.subr.mxu0 0.0
    %560 = vmatpush1.msra.mxu0 %v533
    %561 = vmatprep.subr.mxu0 0.0
    %562 = vmatpush1.msra.mxu0 %v534
    %563 = vmatprep.subr.mxu0 0.0
    %564 = vmatpush1.msra.mxu0 %v535
    %565 = vmatprep.subr.mxu0 0.0
    %566 = vmatpush1.msra.mxu0 %v536
    %567 = vmatprep.subr.mxu0 0.0
    %568 = vmatpush1.msra.mxu0 %v537
    %569 = vmatprep.subr.mxu0 0.0
    %570 = vmatpush1.msra.mxu0 %v538
    %571 = vmatprep.subr.mxu0 0.0
    %572 = vmatpush1.msra.mxu0 0.0
    %573 = vmatprep.subr.mxu0 0.0
    %574 = vmatpush1.msra.mxu0 0.0
    %575 = vmatprep.subr.mxu0 0.0
    %576 = vmatpush1.msra.mxu0 0.0
    %577 = vmatprep.subr.mxu0 0.0
    %578 = vmatpush1.msra.mxu0 0.0
    %579 = vmatprep.subr.mxu0 0.0
    %580 = vmatpush1.msra.mxu0 0.0
    %581 = vmatprep.subr.mxu0 0.0
    %582 = vmatpush1.msra.mxu0 0.0
    %583 = vmatprep.subr.mxu0 0.0
    %584 = vmatpush1.msra.mxu0 0.0
    %585 = vmatprep.subr.mxu0 0.0
    %586 = vmatpush1.msra.mxu0 0.0
    %587 = vmatprep.subr.mxu0 0.0
    %588 = vmatpush1.msra.mxu0 0.0
    %589 = vmatprep.subr.mxu0 0.0
    %590 = vmatpush1.msra.mxu0 0.0
    %591 = vmatprep.subr.mxu0 0.0
    %592 = vmatpush1.msra.mxu0 0.0
    %593 = vmatprep.subr.mxu0 0.0
    %594 = vmatpush1.msra.mxu0 0.0
    %595 = vmatprep.subr.mxu0 0.0
    %596 = vmatpush1.msra.mxu0 0.0
    %597 = vmatprep.subr.mxu0 0.0
    %598 = vmatpush1.msra.mxu0 0.0
    %599 = vmatprep.subr.mxu0 0.0
    %600 = vmatpush1.msra.mxu0 0.0
    %601 = vmatprep.subr.mxu0 0.0
    %602 = vmatpush1.msra.mxu0 0.0
    %603 = vmatprep.mubr.f32.mxu0 0.0
    %604 = vmatmul.mubr.f32.gmra.mrb[0].mxu0 %v511
    %v605 = vpop.f32.mrb[0].mxu0
    %v606 = vadd.f32 0.0, %v605
    %v607 = vpop.f32.mrb[0].mxu0
    %608 = vmatprep.mubr.f32.mxu0 0.0
    %609 = vmatmul.mubr.f32.gmra.mrb[0].mxu0 %v512
    %v610 = vpop.f32.mrb[0].mxu0
    %v611 = vadd.f32 0.0, %v610
    %v612 = vpop.f32.mrb[0].mxu0
    %613 = vmatprep.mubr.f32.mxu0 0.0
    %614 = vmatmul.mubr.f32.gmra.mrb[0].mxu0 %v513
    %v615 = vpop.f32.mrb[0].mxu0
    %v616 = vadd.f32 0.0, %v615
    %v617 = vpop.f32.mrb[0].mxu0
    %618 = vmatprep.mubr.f32.mxu0 0.0
    %619 = vmatmul.mubr.f32.gmra.mrb[0].mxu0 %v514
    %v620 = vpop.f32.mrb[0].mxu0
    %v621 = vadd.f32 0.0, %v620
    %v622 = vpop.f32.mrb[0].mxu0
    %623 = vmatprep.mubr.f32.mxu0 0.0
    %624 = vmatmul.mubr.f32.gmra.mrb[0].mxu0 %v515
    %v625 = vpop.f32.mrb[0].mxu0
    %v626 = vadd.f32 0.0, %v625
    %v627 = vpop.f32.mrb[0].mxu0
    %628 = vmatprep.mubr.f32.mxu0 0.0
    %629 = vmatmul.mubr.f32.gmra.mrb[0].mxu0 %v516
    %v630 = vpop.f32.mrb[0].mxu0
    %v631 = vadd.f32 0.0, %v630
    %v632 = vpop.f32.mrb[0].mxu0
    %633 = vmatprep.mubr.f32.mxu0 0.0
    %634 = vmatmul.mubr.f32.gmra.mrb[0].mxu0 %v517
    %v635 = vpop.f32.mrb[0].mxu0
    %v636 = vadd.f32 0.0, %v635
    %v637 = vpop.f32.mrb[0].mxu0
    %638 = vmatprep.mubr.f32.mxu0 0.0
    %639 = vmatmul.mubr.f32.gmra.mrb[0].mxu0 %v518
    %v640 = vpop.f32.mrb[0].mxu0
    %v641 = vadd.f32 0.0, %v640
    %v642 = vpop.f32.mrb[0].mxu0
    %643 = vmatprep.mubr.f32.mxu0 0.0
    %644 = vmatmul.mubr.f32.gmra.mrb[0].mxu0 %v519
    %v645 = vpop.f32.mrb[0].mxu0
    %v646 = vadd.f32 0.0, %v645
    %v647 = vpop.f32.mrb[0].mxu0
    %648 = vmatprep.mubr.f32.mxu0 0.0
    %649 = vmatmul.mubr.f32.gmra.mrb[0].mxu0 %v520
    %v650 = vpop.f32.mrb[0].mxu0
    %v651 = vadd.f32 0.0, %v650
    %v652 = vpop.f32.mrb[0].mxu0
    %653 = vmatprep.mubr.f32.mxu0 0.0
    %654 = vmatmul.mubr.f32.gmra.mrb[0].mxu0 %v521
    %v655 = vpop.f32.mrb[0].mxu0
    %v656 = vadd.f32 0.0, %v655
    %v657 = vpop.f32.mrb[0].mxu0
    %658 = vmatprep.mubr.f32.mxu0 0.0
    %659 = vmatmul.mubr.f32.gmra.mrb[0].mxu0 %v522
    %v660 = vpop.f32.mrb[0].mxu0
    %v661 = vadd.f32 0.0, %v660
    %v662 = vpop.f32.mrb[0].mxu0
    %663 = vdwg.mxu0
    %v664 = vld [vmem:[%s5] sm:$0xff]
    %v665 = vld [vmem:[%s5 + $0x8] sm:$0xff]
    %v666 = vld [vmem:[%s5 + $0x10] sm:$0xff]
    %v667 = vld [vmem:[%s5 + $0x18] sm:$0xff]
    %v668 = vld [vmem:[%s5 + $0x20] sm:$0xff]
    %v669 = vld [vmem:[%s5 + $0x28] sm:$0xff]
    %v671 = vsel %vm265, %v664, 0
    %v674 = vsel %vm265, %v665, 0
    %v677 = vsel %vm265, %v666, 0
    %v680 = vsel %vm265, %v667, 0
    %v683 = vsel %vm265, %v668, 0
    %v686 = vsel %vm265, %v669, 0
    %688 = vmatprep.subr.mxu0 0.0
    %689 = vmatpush1.msra.mxu0 %v606
    %690 = vmatprep.subr.mxu0 0.0
    %691 = vmatpush1.msra.mxu0 %v611
    %692 = vmatprep.subr.mxu0 0.0
    %693 = vmatpush1.msra.mxu0 %v616
    %694 = vmatprep.subr.mxu0 0.0
    %695 = vmatpush1.msra.mxu0 %v621
    %696 = vmatprep.subr.mxu0 0.0
    %697 = vmatpush1.msra.mxu0 %v626
    %698 = vmatprep.subr.mxu0 0.0
    %699 = vmatpush1.msra.mxu0 %v631
    %700 = vmatprep.subr.mxu0 0.0
    %701 = vmatpush1.msra.mxu0 0.0
    %702 = vmatprep.subr.mxu0 0.0
    %703 = vmatpush1.msra.mxu0 0.0
    %704 = vmatprep.subr.mxu0 0.0
    %705 = vmatpush1.msra.mxu0 0.0
    %706 = vmatprep.subr.mxu0 0.0
    %707 = vmatpush1.msra.mxu0 0.0
    %708 = vmatprep.subr.mxu0 0.0
    %709 = vmatpush1.msra.mxu0 0.0
    %710 = vmatprep.subr.mxu0 0.0
    %711 = vmatpush1.msra.mxu0 0.0
    %712 = vmatprep.subr.mxu0 0.0
    %713 = vmatpush1.msra.mxu0 0.0
    %714 = vmatprep.subr.mxu0 0.0
    %715 = vmatpush1.msra.mxu0 0.0
    %716 = vmatprep.subr.mxu0 0.0
    %717 = vmatpush1.msra.mxu0 0.0
    %718 = vmatprep.subr.mxu0 0.0
    %719 = vmatpush1.msra.mxu0 0.0
    %720 = vmatprep.subr.mxu0 0.0
    %721 = vmatpush1.msra.mxu0 0.0
    %722 = vmatprep.subr.mxu0 0.0
    %723 = vmatpush1.msra.mxu0 0.0
    %724 = vmatprep.subr.mxu0 0.0
    %725 = vmatpush1.msra.mxu0 0.0
    %726 = vmatprep.subr.mxu0 0.0
    %727 = vmatpush1.msra.mxu0 0.0
    %728 = vmatprep.subr.mxu0 0.0
    %729 = vmatpush1.msra.mxu0 0.0
    %730 = vmatprep.subr.mxu0 0.0
    %731 = vmatpush1.msra.mxu0 0.0
    %732 = vmatprep.subr.mxu0 0.0
    %733 = vmatpush1.msra.mxu0 0.0
    %734 = vmatprep.subr.mxu0 0.0
    %735 = vmatpush1.msra.mxu0 0.0
    %736 = vmatprep.subr.mxu0 0.0
    %737 = vmatpush1.msra.mxu0 0.0
    %738 = vmatprep.subr.mxu0 0.0
    %739 = vmatpush1.msra.mxu0 0.0
    %740 = vmatprep.subr.mxu0 0.0
    %741 = vmatpush1.msra.mxu0 0.0
    %742 = vmatprep.subr.mxu0 0.0
    %743 = vmatpush1.msra.mxu0 0.0
    %744 = vmatprep.subr.mxu0 0.0
    %745 = vmatpush1.msra.mxu0 0.0
    %746 = vmatprep.subr.mxu0 0.0
    %747 = vmatpush1.msra.mxu0 0.0
    %748 = vmatprep.subr.mxu0 0.0
    %749 = vmatpush1.msra.mxu0 0.0
    %750 = vmatprep.subr.mxu0 0.0
    %751 = vmatpush1.msra.mxu0 0.0
    %752 = vmatprep.mubr.f32.mxu0 0.0
    %753 = vmatmul.mubr.f32.gmra.mrb[0].mxu0 %v671
    %v754 = vpop.f32.mrb[0].mxu0
    %v755 = vadd.f32 0.0, %v754
    %v756 = vpop.f32.mrb[0].mxu0
    %757 = vmatprep.mubr.f32.mxu0 0.0
    %758 = vmatmul.mubr.f32.gmra.mrb[0].mxu0 %v674
    %v759 = vpop.f32.mrb[0].mxu0
    %v760 = vadd.f32 0.0, %v759
    %v761 = vpop.f32.mrb[0].mxu0
    %762 = vmatprep.mubr.f32.mxu0 0.0
    %763 = vmatmul.mubr.f32.gmra.mrb[0].mxu0 %v677
    %v764 = vpop.f32.mrb[0].mxu0
    %v765 = vadd.f32 0.0, %v764
    %v766 = vpop.f32.mrb[0].mxu0
    %767 = vmatprep.mubr.f32.mxu0 0.0
    %768 = vmatmul.mubr.f32.gmra.mrb[0].mxu0 %v680
    %v769 = vpop.f32.mrb[0].mxu0
    %v770 = vadd.f32 0.0, %v769
    %v771 = vpop.f32.mrb[0].mxu0
    %772 = vmatprep.mubr.f32.mxu0 0.0
    %773 = vmatmul.mubr.f32.gmra.mrb[0].mxu0 %v683
    %v774 = vpop.f32.mrb[0].mxu0
    %v775 = vadd.f32 0.0, %v774
    %v776 = vpop.f32.mrb[0].mxu0
    %777 = vmatprep.mubr.f32.mxu0 0.0
    %778 = vmatmul.mubr.f32.gmra.mrb[0].mxu0 %v686
    %v779 = vpop.f32.mrb[0].mxu0
    %v780 = vadd.f32 0.0, %v779
    %v781 = vpop.f32.mrb[0].mxu0
    %782 = vdwg.mxu0
    %783 = vmatprep.subr.mxu0 0.0
    %784 = vmatpush1.msra.mxu0 %v636
    %785 = vmatprep.subr.mxu0 0.0
    %786 = vmatpush1.msra.mxu0 %v641
    %787 = vmatprep.subr.mxu0 0.0
    %788 = vmatpush1.msra.mxu0 %v646
    %789 = vmatprep.subr.mxu0 0.0
    %790 = vmatpush1.msra.mxu0 %v651
    %791 = vmatprep.subr.mxu0 0.0
    %792 = vmatpush1.msra.mxu0 %v656
    %793 = vmatprep.subr.mxu0 0.0
    %794 = vmatpush1.msra.mxu0 %v661
    %795 = vmatprep.subr.mxu0 0.0
    %796 = vmatpush1.msra.mxu0 0.0
    %797 = vmatprep.subr.mxu0 0.0
    %798 = vmatpush1.msra.mxu0 0.0
    %799 = vmatprep.subr.mxu0 0.0
    %800 = vmatpush1.msra.mxu0 0.0
    %801 = vmatprep.subr.mxu0 0.0
    %802 = vmatpush1.msra.mxu0 0.0
    %803 = vmatprep.subr.mxu0 0.0
    %804 = vmatpush1.msra.mxu0 0.0
    %805 = vmatprep.subr.mxu0 0.0
    %806 = vmatpush1.msra.mxu0 0.0
    %807 = vmatprep.subr.mxu0 0.0
    %808 = vmatpush1.msra.mxu0 0.0
    %809 = vmatprep.subr.mxu0 0.0
    %810 = vmatpush1.msra.mxu0 0.0
    %811 = vmatprep.subr.mxu0 0.0
    %812 = vmatpush1.msra.mxu0 0.0
    %813 = vmatprep.subr.mxu0 0.0
    %814 = vmatpush1.msra.mxu0 0.0
    %815 = vmatprep.subr.mxu0 0.0
    %816 = vmatpush1.msra.mxu0 0.0
    %817 = vmatprep.subr.mxu0 0.0
    %818 = vmatpush1.msra.mxu0 0.0
    %819 = vmatprep.subr.mxu0 0.0
    %820 = vmatpush1.msra.mxu0 0.0
    %821 = vmatprep.subr.mxu0 0.0
    %822 = vmatpush1.msra.mxu0 0.0
    %823 = vmatprep.subr.mxu0 0.0
    %824 = vmatpush1.msra.mxu0 0.0
    %825 = vmatprep.subr.mxu0 0.0
    %826 = vmatpush1.msra.mxu0 0.0
    %827 = vmatprep.subr.mxu0 0.0
    %828 = vmatpush1.msra.mxu0 0.0
    %829 = vmatprep.subr.mxu0 0.0
    %830 = vmatpush1.msra.mxu0 0.0
    %831 = vmatprep.subr.mxu0 0.0
    %832 = vmatpush1.msra.mxu0 0.0
    %833 = vmatprep.subr.mxu0 0.0
    %834 = vmatpush1.msra.mxu0 0.0
    %835 = vmatprep.subr.mxu0 0.0
    %836 = vmatpush1.msra.mxu0 0.0
    %837 = vmatprep.subr.mxu0 0.0
    %838 = vmatpush1.msra.mxu0 0.0
    %839 = vmatprep.subr.mxu0 0.0
    %840 = vmatpush1.msra.mxu0 0.0
    %841 = vmatprep.subr.mxu0 0.0
    %842 = vmatpush1.msra.mxu0 0.0
    %843 = vmatprep.subr.mxu0 0.0
    %844 = vmatpush1.msra.mxu0 0.0
    %845 = vmatprep.subr.mxu0 0.0
    %846 = vmatpush1.msra.mxu0 0.0
    %847 = vmatprep.mubr.f32.mxu0 0.0
    %848 = vmatmul.mubr.f32.gmra.mrb[0].mxu0 %v671
    %v849 = vpop.f32.mrb[0].mxu0
    %v850 = vadd.f32 0.0, %v849
    %v851 = vpop.f32.mrb[0].mxu0
    %852 = vmatprep.mubr.f32.mxu0 0.0
    %853 = vmatmul.mubr.f32.gmra.mrb[0].mxu0 %v674
    %v854 = vpop.f32.mrb[0].mxu0
    %v855 = vadd.f32 0.0, %v854
    %v856 = vpop.f32.mrb[0].mxu0
    %857 = vmatprep.mubr.f32.mxu0 0.0
    %858 = vmatmul.mubr.f32.gmra.mrb[0].mxu0 %v677
    %v859 = vpop.f32.mrb[0].mxu0
    %v860 = vadd.f32 0.0, %v859
    %v861 = vpop.f32.mrb[0].mxu0
    %862 = vmatprep.mubr.f32.mxu0 0.0
    %863 = vmatmul.mubr.f32.gmra.mrb[0].mxu0 %v680
    %v864 = vpop.f32.mrb[0].mxu0
    %v865 = vadd.f32 0.0, %v864
    %v866 = vpop.f32.mrb[0].mxu0
    %867 = vmatprep.mubr.f32.mxu0 0.0
    %868 = vmatmul.mubr.f32.gmra.mrb[0].mxu0 %v683
    %v869 = vpop.f32.mrb[0].mxu0
    %v870 = vadd.f32 0.0, %v869
    %v871 = vpop.f32.mrb[0].mxu0
    %872 = vmatprep.mubr.f32.mxu0 0.0
    %873 = vmatmul.mubr.f32.gmra.mrb[0].mxu0 %v686
    %v874 = vpop.f32.mrb[0].mxu0
    %v875 = vadd.f32 0.0, %v874
    %v876 = vpop.f32.mrb[0].mxu0
    %877 = vdwg.mxu0
    %v878 = vld [vmem:[#allocation7] sm:$0xff]
    %v879 = vld [vmem:[#allocation7 + $0x8] sm:$0xff]
    %v880 = vld [vmem:[#allocation7 + $0x10] sm:$0xff]
    %v881 = vld [vmem:[#allocation7 + $0x18] sm:$0xff]
    %v882 = vld [vmem:[#allocation7 + $0x20] sm:$0xff]
    %v883 = vld [vmem:[#allocation7 + $0x28] sm:$0xff]
    %v884 = vmul.f32 %v755, %v878
    %v885 = vmul.f32 %v760, %v879
    %v886 = vmul.f32 %v765, %v880
    %v887 = vmul.f32 %v770, %v881
    %v888 = vmul.f32 %v775, %v882
    %v889 = vmul.f32 %v780, %v883
    %v890 = vmul.f32 %v850, %v878
    %v891 = vmul.f32 %v855, %v879
    %v892 = vmul.f32 %v860, %v880
    %v893 = vmul.f32 %v865, %v881
    %v894 = vmul.f32 %v870, %v882
    %v895 = vmul.f32 %v875, %v883
    %s896 = scalar_lea.vmem [#allocation7], 48
    %v897 = vld [vmem:[%s896] sm:$0xff]
    %v898 = vld [vmem:[%s896 + $0x8] sm:$0xff]
    %v899 = vld [vmem:[%s896 + $0x10] sm:$0xff]
    %v900 = vld [vmem:[%s896 + $0x18] sm:$0xff]
    %v901 = vld [vmem:[%s896 + $0x20] sm:$0xff]
    %v902 = vld [vmem:[%s896 + $0x28] sm:$0xff]
    %v903 = vadd.f32 %v884, %v897
    %v904 = vadd.f32 %v885, %v898
    %v905 = vadd.f32 %v886, %v899
    %v906 = vadd.f32 %v887, %v900
    %v907 = vadd.f32 %v888, %v901
    %v908 = vadd.f32 %v889, %v902
    %v909 = vadd.f32 %v890, %v897
    %v910 = vadd.f32 %v891, %v898
    %v911 = vadd.f32 %v892, %v899
    %v912 = vadd.f32 %v893, %v900
    %v913 = vadd.f32 %v894, %v901
    %v914 = vadd.f32 %v895, %v902
    %v915 = vtanh.pop %v903
    %v916 = vtanh.pop %v904
    %v917 = vtanh.pop %v905
    %v918 = vtanh.pop %v906
    %v919 = vtanh.pop %v907
    %v920 = vtanh.pop %v908
    %v921 = vtanh.pop %v909
    %v922 = vtanh.pop %v910
    %v923 = vtanh.pop %v911
    %v924 = vtanh.pop %v912
    %v925 = vtanh.pop %v913
    %v926 = vtanh.pop %v914
    %v927 = vld [vmem:[%s0] sm:$0xff]
    %v928 = vld [vmem:[%s0 + $0x8] sm:$0xff]
    %v929 = vld [vmem:[%s0 + $0x10] sm:$0xff]
    %v930 = vld [vmem:[%s0 + $0x18] sm:$0xff]
    %v931 = vld [vmem:[%s0 + $0x20] sm:$0xff]
    %v932 = vld [vmem:[%s0 + $0x28] sm:$0xff]
    %v933 = vld [vmem:[%s0 + $0x30] sm:$0xff]
    %v934 = vld [vmem:[%s0 + $0x38] sm:$0xff]
    %v935 = vld [vmem:[%s0 + $0x40] sm:$0xff]
    %v936 = vld [vmem:[%s0 + $0x48] sm:$0xff]
    %v937 = vld [vmem:[%s0 + $0x50] sm:$0xff]
    %v938 = vld [vmem:[%s0 + $0x58] sm:$0xff]
    %v939 = vadd.f32 %v915, %v927
    %v940 = vadd.f32 %v916, %v928
    %v941 = vadd.f32 %v917, %v929
    %v942 = vadd.f32 %v918, %v930
    %v943 = vadd.f32 %v919, %v931
    %v944 = vadd.f32 %v920, %v932
    %v945 = vadd.f32 %v921, %v933
    %v946 = vadd.f32 %v922, %v934
    %v947 = vadd.f32 %v923, %v935
    %v948 = vadd.f32 %v924, %v936
    %v949 = vadd.f32 %v925, %v937
    %v950 = vadd.f32 %v926, %v938
    %951 = vst.msk [vmem:[%s7] sm:$0xff] %vm97, %v939
    %952 = vst.msk [vmem:[%s7 + $0x8] sm:$0xff] %vm97, %v940
    %953 = vst.msk [vmem:[%s7 + $0x10] sm:$0xff] %vm97, %v941
    %954 = vst.msk [vmem:[%s7 + $0x18] sm:$0xff] %vm97, %v942
    %955 = vst.msk [vmem:[%s7 + $0x20] sm:$0xff] %vm97, %v943
    %956 = vst.msk [vmem:[%s7 + $0x28] sm:$0xff] %vm97, %v944
    %957 = vst.msk [vmem:[%s7 + $0x30] sm:$0xff] %vm97, %v945
    %958 = vst.msk [vmem:[%s7 + $0x38] sm:$0xff] %vm97, %v946
    %959 = vst.msk [vmem:[%s7 + $0x40] sm:$0xff] %vm97, %v947
    %960 = vst.msk [vmem:[%s7 + $0x48] sm:$0xff] %vm97, %v948
    %961 = vst.msk [vmem:[%s7 + $0x50] sm:$0xff] %vm97, %v949
    %962 = vst.msk [vmem:[%s7 + $0x58] sm:$0xff] %vm97, %v950
    // Predicated region
    $region46: #{tpu_custom_call.1} parent=1 // pred_check
      _
    $region47: #{tpu_custom_call.1} parent=1 // pred_check_branch
      %964 = sbr.rel (0) target = $region49
    $region48: #{tpu_custom_call.1} parent=1 // pred_region
      _
    $region49: #{tpu_custom_call.1} parent=1 // pred_fallthru
      _
    // Predicated region
    $region50: #{tpu_custom_call.1} parent=1 // pred_check
      _
    $region51: #{tpu_custom_call.1} parent=1 // pred_check_branch
      %966 = sbr.rel (0) target = $region53
    $region52: #{tpu_custom_call.1} parent=1 // pred_region
      _
    $region53: #{tpu_custom_call.1} parent=1 // pred_fallthru
      _
    %967 = vsyncpa [#allocation3], 1
    %968 = vsyncpa [#allocation5], 1
    %969 = vsyncpa [#allocation8], 1

</llo_original>
